<compile_context>
chip_gen: v5e
topology: v5e:2x2
jax: 0.10.0
libtpu: 0.0.40
codegen_flags: <defaults>
</compile_context>

<pallas_src>
import re
import numpy as np
import jax
import jax.numpy as jnp
from jax.experimental import pallas as pl
from jax.experimental.pallas import tpu as pltpu

R_DRY_AIR = 287.058  # J / (kg K)


# ----------------------------------------------------------------------------
# Parameter construction (translated from the PyTorch __init__, numpy only).
# ----------------------------------------------------------------------------
def get_matching_channels_pl(channel_names, v1, v2, p_min, p_max):
    """Synthetic reimplementation of makani.utils.constraints.get_matching_channels_pl:
    finds channels named f'{v}{pressure}' with matching pressure levels in [p_min, p_max]."""
    def parse(name, prefix):
        m = re.fullmatch(prefix + r"(\d+)", name)
        return int(m.group(1)) if m else None

    p1 = {parse(n, v1): i for i, n in enumerate(channel_names) if parse(n, v1) is not None}
    p2 = {parse(n, v2): i for i, n in enumerate(channel_names) if parse(n, v2) is not None}
    common = sorted(p for p in p1 if p in p2 and p_min <= p <= p_max)
    return [p1[p] for p in common], [p2[p] for p in common], [float(p) for p in common]


def build_hydrostatic_params(channel_names, bias, scale, p_min=50, p_max=900):
    """Builds (mapping, inp_scale, inp_bias, out_scale, out_bias) exactly like the
    PyTorch module __init__ (dry-air formula).  bias/scale are [1, C, 1, 1] numpy arrays."""
    z_idx, t_idx, pressures = get_matching_channels_pl(channel_names, "z", "t", p_min, p_max)
    if len(pressures) == 0:
        raise ValueError("no overlapping pressure levels for z and t channels")
    nchan = len(channel_names)
    aux_idx = [i for i in range(nchan) if i not in t_idx + z_idx]
    prefact = 1.0 / R_DRY_AIR

    z_bias = bias[:, z_idx, ...]
    t_bias = bias[:, t_idx, ...]
    z_scale = scale[:, z_idx, ...]
    t_scale = scale[:, t_idx, ...]

    row_indices, col_indices, values = [], [], []
    row_indices.append(t_idx[0]); col_indices.append(0); values.append(1.0)
    for idx in range(1, len(z_idx) + 1):
        row_indices.append(z_idx[idx - 1]); col_indices.append(idx); values.append(1.0)
    for oidx in range(1, len(z_idx)):
        for iidx in range(0, oidx):
            sign = (-1.0) ** (oidx + iidx - 1)
            plog = np.log(pressures[iidx] / pressures[iidx + 1])
            row_indices.append(t_idx[oidx]); col_indices.append(iidx + 2)
            values.append(sign * 2.0 * prefact / plog)
            row_indices.append(t_idx[oidx]); col_indices.append(iidx + 1)
            values.append(-sign * 2.0 * prefact / plog)
        row_indices.append(t_idx[oidx]); col_indices.append(0); values.append((-1.0) ** oidx)
    off_idx = len(z_idx) + 1
    for idx in range(off_idx, off_idx + len(aux_idx)):
        row_indices.append(aux_idx[idx - off_idx]); col_indices.append(idx); values.append(1.0)

    ncols = nchan - len(t_idx) + 1
    mapping = np.zeros((nchan, ncols), dtype=np.float32)
    for r, c, v in zip(row_indices, col_indices, values):
        mapping[r, c] += v  # sparse_coo_tensor.coalesce() sums duplicate entries

    inp_scale = np.ones((ncols,), dtype=np.float32)
    inp_scale[0] = t_scale[0, 0, 0, 0]
    inp_scale[1 : len(z_idx) + 1] = z_scale[0, :, 0, 0]
    inp_bias = np.zeros((ncols,), dtype=np.float32)
    inp_bias[0] = t_bias[0, 0, 0, 0]
    inp_bias[1 : len(z_idx) + 1] = z_bias[0, :, 0, 0]

    out_scale = np.ones((nchan,), dtype=np.float32)
    out_scale[t_idx] = t_scale[0, :, 0, 0]
    out_scale[z_idx] = z_scale[0, :, 0, 0]
    out_bias = np.zeros((nchan,), dtype=np.float32)
    out_bias[t_idx] = t_bias[0, :, 0, 0]
    out_bias[z_idx] = z_bias[0, :, 0, 0]

    return mapping, inp_scale, inp_bias, out_scale, out_bias


def build_fused_device_params(mapping, inp_scale, inp_bias, out_scale, out_bias):
    """One-time host-side fold (float64) of the input/output affines into the
    channel-mixing matrix, uploaded to device ONCE (hoisted out of the hot path):
        out = ((M @ (x * isc + ib)) - ob) / osc
            = [diag(1/osc) @ M @ diag(isc)] @ x + [(M @ ib - ob) / osc]
    Returns (fused_map [Cout,Cin] f32 device array, fused_bias [Cout,1] f32 device array).
    """
    m64 = np.asarray(mapping, dtype=np.float64)
    isc = np.asarray(inp_scale, dtype=np.float64)
    ib = np.asarray(inp_bias, dtype=np.float64)
    osc = np.asarray(out_scale, dtype=np.float64)
    ob = np.asarray(out_bias, dtype=np.float64)
    fused_map = (m64 * isc[None, :]) / osc[:, None]
    fused_bias = (m64 @ ib - ob) / osc
    return (jnp.asarray(fused_map.astype(np.float32)),
            jnp.asarray(fused_bias.astype(np.float32)).reshape(-1, 1))


# ----------------------------------------------------------------------------
# Pallas kernel: fused channel-mixing matmul + bias (affines pre-folded).
# ----------------------------------------------------------------------------
def _hb_kernel(x_ref, map_ref, bias_ref, o_ref):
    # x_ref:    (Cin, T)   — channels on sublanes, spatial tile on lanes
    # map_ref:  (Cout, Cin)
    # bias_ref: (Cout, 1)
    # o_ref:    (Cout, T)
    out = jnp.dot(map_ref[...], x_ref[...], preferred_element_type=jnp.float32)  # MXU
    o_ref[...] = (out + bias_ref[...]).astype(o_ref.dtype)


def _round_up(x, m):
    return ((x + m - 1) // m) * m


def _round_down(x, m):
    return max(m, (x // m) * m)


_MAX_TILE_LANES = 32768    # moderate tile: per-step DMA >> 0.35 us overhead already
_MIN_SPATIAL_TILES = 8     # keep both v7x TCs + DMA pipeline fed even at B=1..2


def _pick_spatial_tile(hw, c_in, c_out):
    """Pick a lane-dim tile T and a vmem_limit_bytes, generation-aware.

    VMEM working set per lane of tile T (f32):
      - 2x double-buffered input columns            (2 * c_in)
      - 2x double-buffered output columns           (2 * c_out)
      - ~2x columns for the f32 dot-result / bias-add temporary (2 * c_out)
    """
    bytes_per_lane = 4 * (2 * c_in + 4 * c_out)
    try:
        vmem_cap = int(pltpu.get_tpu_info().vmem_capacity_bytes)
    except Exception:
        vmem_cap = 64 * 1024 * 1024  # conservative fallback: assume v7x
    budget = min(vmem_cap // 2, 48 * 1024 * 1024)
    vmem_limit = max(32 * 1024 * 1024, min(vmem_cap * 3 // 4, 96 * 1024 * 1024))

    t_budget = _round_down(budget // bytes_per_lane, 128)
    # Cap so the spatial grid axis has >= _MIN_SPATIAL_TILES steps when HW is large.
    t_parallel = max(128, _round_up(pl.cdiv(hw, _MIN_SPATIAL_TILES), 128))
    t = max(128, min(t_budget, _MAX_TILE_LANES, t_parallel))
    if hw <= t:
        # Single full-extent block (legal even if HW is not a multiple of 128).
        return hw, vmem_limit
    return t, vmem_limit


def hydrostatic_balance_forward(x_nchw, fused_map, fused_bias):
    """x_nchw: [B, Cin, H, W].  fused_map: [Cout, Cin] f32.  fused_bias: [Cout, 1] f32.
    Returns [B, Cout, H, W] in x's dtype.  Pure JAX + Pallas; jit-compatible."""
    B, Cin, H, W = x_nchw.shape
    Cout = fused_map.shape[0]
    HW = H * W

    T, vmem_limit = _pick_spatial_tile(HW, Cin, Cout)
    num_tiles = pl.cdiv(HW, T)

    # (B, C, H, W) -> (B, C, H*W) is a free reshape (contiguous last dims merge).
    x = x_nchw.reshape(B, Cin, HW)

    # No padding and no output slice: the ragged last spatial tile (if any) is
    # handled by Pallas' partial-block read/masked writeback.
    out = pl.pallas_call(
        _hb_kernel,
        out_shape=jax.ShapeDtypeStruct((B, Cout, HW), x.dtype),
        grid=(B, num_tiles),
        in_specs=[
            pl.BlockSpec((None, Cin, T), lambda b, s: (b, 0, s)),   # squeezed batch dim
            pl.BlockSpec((Cout, Cin), lambda b, s: (0, 0)),
            pl.BlockSpec((Cout, 1), lambda b, s: (0, 0)),
        ],
        out_specs=pl.BlockSpec((None, Cout, T), lambda b, s: (b, 0, s)),
        compiler_params=pltpu.CompilerParams(
            dimension_semantics=("parallel", "parallel"),
            vmem_limit_bytes=vmem_limit,
        ),
    )(x, fused_map, fused_bias)

    return out.reshape(B, Cout, H, W)


# ----------------------------------------------------------------------------
# Reference (pure JAX, unfused) for validation.
# ----------------------------------------------------------------------------
def hydrostatic_balance_ref(x_nchw, mapping, inp_scale, inp_bias, out_scale, out_bias):
    x_un = x_nchw * inp_scale[None, :, None, None] + inp_bias[None, :, None, None]
    out_un = jnp.einsum("oc,bchw->bohw", mapping, x_un)
    return (out_un - out_bias[None, :, None, None]) / out_scale[None, :, None, None]


if __name__ == "__main__":
    # Synthetic channel set: 4 aux channels + 3 (z, t) pressure-level pairs.
    channel_names = ["u10m", "v10m", "t2m", "msl",
                     "z50", "t50", "z500", "t500", "z850", "t850"]
    nchan = len(channel_names)

    # Deterministic per-channel normalization stats (stand-ins for dataset bias/scale).
    bias = (0.01 * np.arange(nchan, dtype=np.float32)).reshape(1, nchan, 1, 1)
    scale = (1.0 + 0.1 * np.arange(nchan, dtype=np.float32)).reshape(1, nchan, 1, 1)

    mapping_np, isc_np, ib_np, osc_np, ob_np = build_hydrostatic_params(
        channel_names, bias, scale, p_min=50, p_max=900
    )

    # One-time build-step fold + device upload (hoisted out of the forward path).
    fused_map, fused_bias = build_fused_device_params(
        mapping_np, isc_np, ib_np, osc_np, ob_np
    )

    # Input has ncols = nchan - len(t_idx) + 1 = 8 channels.
    B, Cin, H, W = 2, mapping_np.shape[1], 16, 16
    key = jax.random.PRNGKey(0)
    x = jax.random.normal(key, (B, Cin, H, W), dtype=jnp.float32)

    fwd = jax.jit(hydrostatic_balance_forward)
    out = fwd(x, fused_map, fused_bias)
    out = jax.block_until_ready(out)

    ref = hydrostatic_balance_ref(
        x, jnp.asarray(mapping_np), jnp.asarray(isc_np), jnp.asarray(ib_np),
        jnp.asarray(osc_np), jnp.asarray(ob_np)
    )
    np.testing.assert_allclose(np.asarray(out), np.asarray(ref), rtol=1e-5, atol=1e-5)

    # TODO(synk): use_moist_air_formula=True branch (q-channel coupling) not implemented.
    print("KERNEL_OK")
</pallas_src>

<mosaic_0001>
module attributes {stable_mosaic.version = 11 : i64} {
  func.func @_hb_kernel(%arg0: i32, %arg1: i32, %arg2: memref<1x8x128xf32, #tpu.memory_space<vmem>>, %arg3: memref<10x8xf32, #tpu.memory_space<vmem>>, %arg4: memref<10x1xf32, #tpu.memory_space<vmem>>, %arg5: memref<1x10x128xf32, #tpu.memory_space<vmem>>) attributes {dimension_semantics = [#tpu.dimension_semantics<parallel>, #tpu.dimension_semantics<parallel>], iteration_bounds = array<i64: 2, 2>, scalar_prefetch = 0 : i64, scratch_operands = 0 : i64, tpu.core_type = #tpu.core_type<tc>, window_params = [{transform_indices = @transform_0, window_bounds = array<i64: 1, 8, 128>}, {pipeline_mode = #tpu.pipeline_mode<synchronous>, transform_indices = @transform_1, window_bounds = array<i64: 10, 8>}, {pipeline_mode = #tpu.pipeline_mode<synchronous>, transform_indices = @transform_2, window_bounds = array<i64: 10, 1>}, {transform_indices = @transform_3, window_bounds = array<i64: 1, 10, 128>}]} {
    %c0 = arith.constant 0 : index
    %c0_0 = arith.constant 0 : index
    %0 = vector.load %arg3[%c0, %c0_0] : memref<10x8xf32, #tpu.memory_space<vmem>>, vector<10x8xf32>
    %c0_1 = arith.constant 0 : index
    %c0_2 = arith.constant 0 : index
    %c0_3 = arith.constant 0 : index
    %1 = vector.load %arg2[%c0_1, %c0_2, %c0_3] : memref<1x8x128xf32, #tpu.memory_space<vmem>>, vector<1x8x128xf32>
    %2 = vector.shape_cast %1 : vector<1x8x128xf32> to vector<8x128xf32>
    %cst = arith.constant dense<0.000000e+00> : vector<10x128xf32>
    %3 = tpu.matmul %0, %2, %cst {dimension_numbers = #tpu.dot_dimension_numbers<[1], [0], [0], [1], [0, 0, 1, 1], [], []>} : vector<10x8xf32>, vector<8x128xf32>, vector<10x128xf32> -> vector<10x128xf32>
    %c0_4 = arith.constant 0 : index
    %c0_5 = arith.constant 0 : index
    %4 = vector.load %arg4[%c0_4, %c0_5] : memref<10x1xf32, #tpu.memory_space<vmem>>, vector<10x1xf32>
    %5 = vector.broadcast %4 : vector<10x1xf32> to vector<10x128xf32>
    %6 = arith.addf %3, %5 : vector<10x128xf32>
    %c0_6 = arith.constant 0 : index
    %c0_7 = arith.constant 0 : index
    %c0_8 = arith.constant 0 : index
    %7 = vector.load %arg5[%c0_6, %c0_7, %c0_8] : memref<1x10x128xf32, #tpu.memory_space<vmem>>, vector<1x10x128xf32>
    %8 = vector.shape_cast %7 : vector<1x10x128xf32> to vector<10x128xf32>
    %9 = vector.shape_cast %6 : vector<10x128xf32> to vector<1x10x128xf32>
    tpu.vector_store %arg5[%c0_6, %c0_7, %c0_8], %9 {strides = array<i32>} : memref<1x10x128xf32, #tpu.memory_space<vmem>>, vector<1x10x128xf32>,
    return
  }
  func.func @transform_0(%arg0: i32, %arg1: i32) -> (i32, i32, i32) {
    %c0_i32 = arith.constant 0 : i32
    %c0_i32_0 = arith.constant 0 : i32
    return %arg0, %c0_i32, %arg1 : i32, i32, i32
  }
  func.func @transform_1(%arg0: i32, %arg1: i32) -> (i32, i32) {
    %c0_i32 = arith.constant 0 : i32
    %c0_i32_0 = arith.constant 0 : i32
    %c0_i32_1 = arith.constant 0 : i32
    return %c0_i32, %c0_i32_0 : i32, i32
  }
  func.func @transform_2(%arg0: i32, %arg1: i32) -> (i32, i32) {
    %c0_i32 = arith.constant 0 : i32
    %c0_i32_0 = arith.constant 0 : i32
    %c0_i32_1 = arith.constant 0 : i32
    return %c0_i32, %c0_i32_0 : i32, i32
  }
  func.func @transform_3(%arg0: i32, %arg1: i32) -> (i32, i32, i32) {
    %c0_i32 = arith.constant 0 : i32
    %c0_i32_0 = arith.constant 0 : i32
    return %arg0, %c0_i32, %arg1 : i32, i32, i32
  }
}

</mosaic_0001>

<llo_original>
// kernel: hydrostatic_balance_forward.1
$region0: #{hydrostatic_balance_forward.1}
  #allocation0 [shape = 'u32[]', space=smem, size = 0x4, offset = 0x4, fixed_abs, tag = 'smem constant byte address 0x4 - core index']
  #allocation1 [shape = 'u32[72,128]{1,0:T(1,128)}', space=vmem, size = 0x9000, scoped, tag = 'internal scratch']
  %s0 = inlined_call_operand.vmem [shape: f32[2,8,256], index: 0, kind: input, shape index: {}]
  %s1 = inlined_call_operand.vmem [shape: f32[10,8], index: 1, kind: input, shape index: {}]
  %s2 = inlined_call_operand.vmem [shape: f32[10,1], index: 2, kind: input, shape index: {}]
  %s3 = inlined_call_operand.vmem [shape: f32[2,10,256], index: 3, kind: output, shape index: {}]
  %s4 = sld [smem:[#allocation0]]
  $region79: #{hydrostatic_balance_forward.1} parent=0
    _
  %s6 = ssub.s32 1, %s4
  %s7 = scalar_select 0, %s6, %s4
  $region1: #{hydrostatic_balance_forward.1} parent=0
    #allocation2 [shape = 'u8[16384]{0}', space=vmem, size = 0x4000, scoped, tag = 'output window, operand 0']
    loop: start=0, step=1, limit=6
    $region2: #{hydrostatic_balance_forward.1} parent=1 // loop_pre_header
      _
    $region3: #{hydrostatic_balance_forward.1} parent=1 // loop_header
      %s9 = sphi 0, %s13
      %p10 = scmp.ge.s32.totalorder %s9, 6
      %s16 = sphi 0, %s28
      %s17 = sphi 0, %s24
      %s18 = sphi 0, %s16
      %s19 = sphi 0, %s17
      %s20 = sphi 0, %s18
      %s21 = sphi 0, %s19
      %s33 = sphi 0, %s35
      %s36 = sphi 0, %s33
      %s37 = sphi 0, %s36
      %s53 = sphi 0, %s37
      %s57 = sphi 0, %s57
      %s59 = sphi 0, %s57
      %s60 = sphi 0, %s59
      %s74 = sphi 0, %s60
      %s78 = sphi 0, %s78
      %s80 = sphi 0, %s78
      %s81 = sphi 0, %s80
      %s95 = sphi 0, %s81
      %s103 = sphi 0, %s105
      %s106 = sphi 0, %s103
      %s107 = sphi 0, %s106
      %s123 = sphi 0, %s107
    $region4: #{hydrostatic_balance_forward.1} parent=1 // loop_header_branch
      %12 = sbr.rel (%p10) target = $region8
    $region5: #{hydrostatic_balance_forward.1} parent=1 // loop_body
      %s14 = ssub.s32 %s9, 1
      %s15 = ssub.s32 %s9, 2
      %s22 = sadd.s32 1, %s17
      %p23 = scmp.ge.s32.totalorder %s22, 2
      %s24 = scalar_select %p23, 0, %s22
      %s25 = sadd.s32 1, %s16
      %s26 = scalar_select %p23, %s25, %s16
      %p27 = scmp.ge.s32.totalorder %s26, 2
      %s28 = scalar_select %p27, 0, %s26
      %s29 = ssub.s32 %s16, %s28
      %s30 = ssub.s32 %s17, %s24
      %s31 = sor.u32 %s29, %s30
      %p32 = scmp.eq.s32.totalorder %s31, 0
      %s34 = sadd.s32 %s33, 1
      %s35 = scalar_select %p32, %s33, %s34
      %p38 = pneg %p32
      %p39 = scmp.eq.s32.totalorder %s9, 3
      %p40 = por %p38, %p39
      %p41 = scmp.ne.s32.totalorder %s33, %s36
      %p42 = scmp.eq.s32.totalorder %s9, 0
      %p43 = por %p41, %p42
      %p44 = scmp.ne.s32.totalorder %s33, %s36
      %p45 = scmp.eq.s32.totalorder %s14, 3
      %p46 = por %p44, %p45
      %p47 = scmp.ne.s32.totalorder %s36, %s37
      %p48 = scmp.eq.s32.totalorder %s14, 0
      %p49 = por %p47, %p48
      %p50 = scmp.ne.s32.totalorder %s36, %s37
      %p51 = scmp.eq.s32.totalorder %s15, 3
      %p52 = por %p50, %p51
      %p54 = scmp.ne.s32.totalorder %s37, %s53
      %p55 = scmp.eq.s32.totalorder %s15, 0
      %p56 = por %p54, %p55
      %s58 = sadd.s32 %s57, 1
      %p61 = scmp.eq.s32.totalorder %s9, 3
      %p62 = scmp.ne.s32.totalorder %s57, %s59
      %p63 = scmp.eq.s32.totalorder %s9, 0
      %p64 = por %p62, %p63
      %p65 = scmp.ne.s32.totalorder %s57, %s59
      %p66 = scmp.eq.s32.totalorder %s14, 3
      %p67 = por %p65, %p66
      %p68 = scmp.ne.s32.totalorder %s59, %s60
      %p69 = scmp.eq.s32.totalorder %s14, 0
      %p70 = por %p68, %p69
      %p71 = scmp.ne.s32.totalorder %s59, %s60
      %p72 = scmp.eq.s32.totalorder %s15, 3
      %p73 = por %p71, %p72
      %p75 = scmp.ne.s32.totalorder %s60, %s74
      %p76 = scmp.eq.s32.totalorder %s15, 0
      %p77 = por %p75, %p76
      %s79 = sadd.s32 %s78, 1
      %p82 = scmp.eq.s32.totalorder %s9, 3
      %p83 = scmp.ne.s32.totalorder %s78, %s80
      %p84 = scmp.eq.s32.totalorder %s9, 0
      %p85 = por %p83, %p84
      %p86 = scmp.ne.s32.totalorder %s78, %s80
      %p87 = scmp.eq.s32.totalorder %s14, 3
      %p88 = por %p86, %p87
      %p89 = scmp.ne.s32.totalorder %s80, %s81
      %p90 = scmp.eq.s32.totalorder %s14, 0
      %p91 = por %p89, %p90
      %p92 = scmp.ne.s32.totalorder %s80, %s81
      %p93 = scmp.eq.s32.totalorder %s15, 3
      %p94 = por %p92, %p93
      %p96 = scmp.ne.s32.totalorder %s81, %s95
      %p97 = scmp.eq.s32.totalorder %s15, 0
      %p98 = por %p96, %p97
      %s99 = ssub.s32 %s16, %s28
      %s100 = ssub.s32 %s17, %s24
      %s101 = sor.u32 %s99, %s100
      %p102 = scmp.eq.s32.totalorder %s101, 0
      %s104 = sadd.s32 %s103, 1
      %s105 = scalar_select %p102, %s103, %s104
      %p108 = pneg %p102
      %p109 = scmp.eq.s32.totalorder %s9, 3
      %p110 = por %p108, %p109
      %p111 = scmp.ne.s32.totalorder %s103, %s106
      %p112 = scmp.eq.s32.totalorder %s9, 0
      %p113 = por %p111, %p112
      %p114 = scmp.ne.s32.totalorder %s103, %s106
      %p115 = scmp.eq.s32.totalorder %s14, 3
      %p116 = por %p114, %p115
      %p117 = scmp.ne.s32.totalorder %s106, %s107
      %p118 = scmp.eq.s32.totalorder %s14, 0
      %p119 = por %p117, %p118
      %p120 = scmp.ne.s32.totalorder %s106, %s107
      %p121 = scmp.eq.s32.totalorder %s15, 3
      %p122 = por %p120, %p121
      %p124 = scmp.ne.s32.totalorder %s107, %s123
      %p125 = scmp.eq.s32.totalorder %s15, 0
      %p126 = por %p124, %p125
      %p127 = scmp.le.s32.totalorder 1, %s9
      %p128 = scmp.lt.s32.totalorder %s9, 5
      %p129 = pnand %p127, %p128
      %p130 = pneg %p129
      // Predicated region
      $region9: #{hydrostatic_balance_forward.1} parent=5 // pred_check
        _
      $region10: #{hydrostatic_balance_forward.1} parent=5 // pred_check_branch
        %132 = sbr.rel (%p129) target = $region12
      $region11: #{hydrostatic_balance_forward.1} parent=5 // pred_region
        %s133 = ssub.s32 %s9, 1
        // Predicated region
        $region13: #{hydrostatic_balance_forward.1} parent=11 // pred_check
          %p134 = pneg %p70
        $region14: #{hydrostatic_balance_forward.1} parent=11 // pred_check_branch
          %136 = sbr.rel (%p134) target = $region16
        $region15: #{hydrostatic_balance_forward.1} parent=11 // pred_region
          _
        $region16: #{hydrostatic_balance_forward.1} parent=11 // pred_fallthru
          _
        // Predicated region
        $region17: #{hydrostatic_balance_forward.1} parent=11 // pred_check
          %p137 = pneg %p91
        $region18: #{hydrostatic_balance_forward.1} parent=11 // pred_check_branch
          %139 = sbr.rel (%p137) target = $region20
        $region19: #{hydrostatic_balance_forward.1} parent=11 // pred_region
          _
        $region20: #{hydrostatic_balance_forward.1} parent=11 // pred_fallthru
          _
      $region12: #{hydrostatic_balance_forward.1} parent=5 // pred_fallthru
        _
      %p140 = scmp.lt.s32.totalorder %s9, 4
      // Predicated region
      $region21: #{hydrostatic_balance_forward.1} parent=5 // pred_check
        %p141 = pneg %p140
      $region22: #{hydrostatic_balance_forward.1} parent=5 // pred_check_branch
        %143 = sbr.rel (%p141) target = $region24
      $region23: #{hydrostatic_balance_forward.1} parent=5 // pred_region
        // Predicated region
        $region25: #{hydrostatic_balance_forward.1} parent=23 // pred_check
          %p144 = pneg %p43
        $region26: #{hydrostatic_balance_forward.1} parent=23 // pred_check_branch
          %146 = sbr.rel (%p144) target = $region28
        $region27: #{hydrostatic_balance_forward.1} parent=23 // pred_region
          %p147 = scmp.lt.s32.totalorder %s16, 1
          %s148 = scalar_select %p147, %s16, 1
          %p149 = scmp.lt.s32.totalorder %s17, 1
          %s150 = scalar_select %p149, %s17, 1
          %s151 = smul.addr %s148, 2
          %s152 = sadd.s32 %s150, %s151
          %s153 = smul.addr %s152, 8
          %s154 = scalar_lea.vmem %s0, %s153
        $region28: #{hydrostatic_balance_forward.1} parent=23 // pred_fallthru
          _
      $region24: #{hydrostatic_balance_forward.1} parent=5 // pred_fallthru
        _
      %p155 = scmp.le.s32.totalorder 1, %s9
      %p156 = scmp.lt.s32.totalorder %s9, 5
      %p157 = pnand %p155, %p156
      %p158 = pneg %p157
      // Predicated region
      $region29: #{hydrostatic_balance_forward.1} parent=5 // pred_check
        _
      $region30: #{hydrostatic_balance_forward.1} parent=5 // pred_check_branch
        %160 = sbr.rel (%p157) target = $region32
      $region31: #{hydrostatic_balance_forward.1} parent=5 // pred_region
        %s161 = ssub.s32 %s9, 1
        %p162 = scmp.lt.s32.totalorder %s18, 1
        %s163 = scalar_select %p162, %s18, 1
        %p164 = scmp.lt.s32.totalorder %s19, 1
        %s165 = scalar_select %p164, %s19, 1
        %s166 = smul.addr %s163, 2
        %s167 = sadd.s32 %s165, %s166
        %s168 = smul.addr %s167, 8
        %s169 = scalar_lea.vmem %s0, %s168
        %p170 = pneg %p49
        %p171 = pneg %p46
        %p172 = pneg %p70
        %p173 = pneg %p67
        %p174 = pneg %p91
        %p175 = pneg %p88
        %p176 = pneg %p119
        %p177 = pneg %p116
        %s178 = sand.u32 %s106, 1
        %s179 = sand.u32 %s106, 1
        %s180 = smul.addr %s179, 16
        %s181 = scalar_lea.vmem [#allocation2], %s180
        %p182 = scmp.lt.s32.totalorder %s18, 1
        %s183 = scalar_select %p182, %s18, 1
        %p184 = scmp.lt.s32.totalorder %s19, 1
        %s185 = scalar_select %p184, %s19, 1
        %s186 = smul.addr %s183, 2
        %s187 = sadd.s32 %s185, %s186
        %s188 = smul.addr %s187, 8
        %s189 = scalar_lea.vmem %s0, %s188
        %v190 = vld [vmem:[%s1] sm:$0xff]
        %v191 = vld [vmem:[%s1 + $0x8] sm:$0x3]
        %v192 = vld [vmem:[%s189] sm:$0xff]
        %v193 = vld [vmem:[%s2] sm:$0xff]
        %v194 = vld [vmem:[%s2 + $0x8] sm:$0x3]
        %196 = vset.pattern.permute.xlu0 0
        %197 = vperm.xlu0 %196, %v193
        %v198 = vpop.permute.xlu0 %197
        %201 = vset.pattern.permute.xlu0 0
        %202 = vperm.xlu0 %201, %v194
        %v203 = vpop.permute.xlu0 %202
        %vm205 = vcmask 64512
        %v207 = vsel %vm205, %v190, 0
        %v210 = vsel %vm205, %v191, 0
        %212 = vmatpush.msra.mxu0 0.0
        %213 = vmatpush.msra.mxu0 0.0
        %214 = vmatpush.msra.mxu0 0.0
        %215 = vmatpush.msra.mxu0 0.0
        %216 = vmatpush.msra.mxu0 0.0
        %217 = vmatpush.msra.mxu0 0.0
        %218 = vmatpush.msra.mxu0 0.0
        %219 = vmatpush.msra.mxu0 0.0
        %220 = vmatpush.msra.mxu0 0.0
        %221 = vmatpush.msra.mxu0 0.0
        %222 = vmatpush.msra.mxu0 0.0
        %223 = vmatpush.msra.mxu0 0.0
        %224 = vmatpush.msra.mxu0 0.0
        %225 = vmatpush.msra.mxu0 0.0
        %226 = vmatpush.msra.mxu0 0.0
        %227 = vmatpush.msra.mxu0 %v192
        %228 = vmatmul.f32.gmra.mxu0 %v207
        %v229 = vpop.f32.mrf.mxu0
        %v230 = vadd.f32 %v198, %v229
        %231 = vmatmul.f32.gmra.mxu0 %v210
        %v232 = vpop.f32.mrf.mxu0
        %v233 = vadd.f32 %v203, %v232
        %234 = vdwg.mxu0
        %235 = vst [vmem:[%s181] sm:$0xff] %v230
        %236 = vst [vmem:[%s181 + $0x8] sm:$0x3] %v233
        %s237 = sand.u32 %s106, 1
        %s238 = sand.u32 %s106, 1
        %s239 = smul.addr %s238, 16
        %s240 = scalar_lea.vmem [#allocation2], %s239
        // Predicated region
        $region33: #{hydrostatic_balance_forward.1} parent=31 // pred_check
          %p241 = pneg %p116
        $region34: #{hydrostatic_balance_forward.1} parent=31 // pred_check_branch
          %243 = sbr.rel (%p241) target = $region36
        $region35: #{hydrostatic_balance_forward.1} parent=31 // pred_region
          %s244 = smul.addr %s18, 4
          %s245 = sadd.s32 %s19, %s244
          %s246 = smul.addr %s245, 8
          %s247 = scalar_lea.vmem %s3, %s246
          // Predicated region
          $region37: #{hydrostatic_balance_forward.1} parent=35 // pred_check
            _
          $region38: #{hydrostatic_balance_forward.1} parent=35 // pred_check_branch
            %249 = sbr.rel (0) target = $region40
          $region39: #{hydrostatic_balance_forward.1} parent=35 // pred_region
            // Predicated region
            $region41: #{hydrostatic_balance_forward.1} parent=39 // pred_check
              _
            $region42: #{hydrostatic_balance_forward.1} parent=39 // pred_check_branch
              %251 = sbr.rel (0) target = $region44
            $region43: #{hydrostatic_balance_forward.1} parent=39 // pred_region
              // Predicated region
              $region56: #{hydrostatic_balance_forward.1} parent=43 // pred_check
                _
              $region57: #{hydrostatic_balance_forward.1} parent=43 // pred_check_branch
                %269 = sbr.rel (0) target = $region59
              $region58: #{hydrostatic_balance_forward.1} parent=43 // pred_region
                loop: start=0, step=1, limit=1
                $region60: #{hydrostatic_balance_forward.1} parent=58 // loop_pre_header
                  _
                $region61: #{hydrostatic_balance_forward.1} parent=58 // loop_header
                  %s271 = sphi 0, %s275
                  %p272 = scmp.ge.s32.totalorder %s271, 1
                  %s276 = sphi %s240, %s240
                  %s277 = sphi %s247, %s247
                $region62: #{hydrostatic_balance_forward.1} parent=58 // loop_header_branch
                  %274 = sbr.rel (%p272) target = $region66
                $region63: #{hydrostatic_balance_forward.1} parent=58 // loop_body
                  %v278 = vld [vmem:[%s276] sm:$0xff]
                  %279 = vst [vmem:[%s277] sm:$0xff] %v278
                  %v280 = vld [vmem:[%s276 + $0x8] sm:$0xff]
                  %281 = vst [vmem:[%s277 + $0x10] sm:$0xff] %v280
                $region64: #{hydrostatic_balance_forward.1} parent=58 // loop_footer
                  %s275 = sadd.s32 1, %s271
                $region65: #{hydrostatic_balance_forward.1} parent=58 // loop_footer_branch
                  %270 = sbr.rel target = $region61
                $region66: #{hydrostatic_balance_forward.1} parent=58 // loop_exit
                  _
              $region59: #{hydrostatic_balance_forward.1} parent=43 // pred_fallthru
                _
              // Predicated region
              $region67: #{hydrostatic_balance_forward.1} parent=43 // pred_check
                _
              $region68: #{hydrostatic_balance_forward.1} parent=43 // pred_check_branch
                %283 = sbr.rel target = $region70
              $region69: #{hydrostatic_balance_forward.1} parent=43 // pred_region
                _
              $region70: #{hydrostatic_balance_forward.1} parent=43 // pred_fallthru
                _
            $region44: #{hydrostatic_balance_forward.1} parent=39 // pred_fallthru
              _
            // Predicated region
            $region45: #{hydrostatic_balance_forward.1} parent=39 // pred_check
              _
            $region46: #{hydrostatic_balance_forward.1} parent=39 // pred_check_branch
              %253 = sbr.rel target = $region48
            $region47: #{hydrostatic_balance_forward.1} parent=39 // pred_region
              %s255 = ssub.s32 256, 1
              loop: start=0, step=1, limit=1
              $region49: #{hydrostatic_balance_forward.1} parent=47 // loop_pre_header
                _
              $region50: #{hydrostatic_balance_forward.1} parent=47 // loop_header
                %s257 = sphi 0, %s261
                %p258 = scmp.ge.s32.totalorder %s257, 1
                %s262 = sphi %s240, %s240
                %s263 = sphi %s247, %s247
              $region51: #{hydrostatic_balance_forward.1} parent=47 // loop_header_branch
                %260 = sbr.rel (%p258) target = $region55
              $region52: #{hydrostatic_balance_forward.1} parent=47 // loop_body
                %v264 = vld [vmem:[%s262] sm:%s255]
                %265 = vst [vmem:[%s263] sm:%s255] %v264
                %v266 = vld [vmem:[%s262 + $0x8] sm:%s255]
                %267 = vst [vmem:[%s263 + $0x10] sm:%s255] %v266
              $region53: #{hydrostatic_balance_forward.1} parent=47 // loop_footer
                %s261 = sadd.s32 1, %s257
              $region54: #{hydrostatic_balance_forward.1} parent=47 // loop_footer_branch
                %256 = sbr.rel target = $region50
              $region55: #{hydrostatic_balance_forward.1} parent=47 // loop_exit
                _
            $region48: #{hydrostatic_balance_forward.1} parent=39 // pred_fallthru
              _
          $region40: #{hydrostatic_balance_forward.1} parent=35 // pred_fallthru
            _
          %284 = vnop
        $region36: #{hydrostatic_balance_forward.1} parent=31 // pred_fallthru
          _
      $region32: #{hydrostatic_balance_forward.1} parent=5 // pred_fallthru
        _
      %p285 = scmp.le.s32.totalorder 2, %s9
      // Predicated region
      $region71: #{hydrostatic_balance_forward.1} parent=5 // pred_check
        %p286 = pneg %p285
      $region72: #{hydrostatic_balance_forward.1} parent=5 // pred_check_branch
        %288 = sbr.rel (%p286) target = $region74
      $region73: #{hydrostatic_balance_forward.1} parent=5 // pred_region
        %s289 = ssub.s32 %s9, 2
        // Predicated region
        $region75: #{hydrostatic_balance_forward.1} parent=73 // pred_check
          %p290 = pneg %p122
        $region76: #{hydrostatic_balance_forward.1} parent=73 // pred_check_branch
          %292 = sbr.rel (%p290) target = $region78
        $region77: #{hydrostatic_balance_forward.1} parent=73 // pred_region
          %s293 = sand.u32 %s107, 1
          %s294 = sand.u32 %s107, 1
          %s295 = smul.addr %s294, 16
          %s296 = scalar_lea.vmem [#allocation2], %s295
        $region78: #{hydrostatic_balance_forward.1} parent=73 // pred_fallthru
          _
      $region74: #{hydrostatic_balance_forward.1} parent=5 // pred_fallthru
        _
    $region6: #{hydrostatic_balance_forward.1} parent=1 // loop_footer
      %s13 = sadd.s32 1, %s9
    $region7: #{hydrostatic_balance_forward.1} parent=1 // loop_footer_branch
      %8 = sbr.rel target = $region3
    $region8: #{hydrostatic_balance_forward.1} parent=1 // loop_exit
      _

</llo_original>
